<compile_context>
chip_gen: v5e
topology: v5e:2x2
jax: 0.10.0
libtpu: 0.0.40
codegen_flags: <defaults>
</compile_context>

<pallas_src>
import jax
import jax.numpy as jnp
from jax.experimental import pallas as pl
from jax.experimental.pallas import tpu as pltpu


def _greedy_head_kernel(x_ref, out_ref, max_sc, idx_sc):
    j = pl.program_id(1)                      # vocab-tile index (reduction axis)
    tv = x_ref.shape[-1]

    @pl.when(j == 0)
    def _init():
        max_sc[...] = jnp.full_like(max_sc, -jnp.inf)
        idx_sc[...] = jnp.zeros_like(idx_sc)

    # `.float()` in the reference: compare in f32 regardless of input dtype.
    x = x_ref[...].astype(jnp.float32)                        # [tT, tV]
    local_max = jnp.max(x, axis=-1, keepdims=True)            # [tT, 1]
    col = jax.lax.broadcasted_iota(jnp.int32, x.shape, 1)     # [tT, tV]
    sentinel = jnp.iinfo(jnp.int32).max
    # lowest column index achieving the tile max -> first-occurrence ties
    local_idx = jnp.min(jnp.where(x == local_max, col, sentinel),
                        axis=-1, keepdims=True)               # [tT, 1]
    global_idx = local_idx + j * tv

    # strict ">" keeps the earlier (lower) index on cross-tile ties
    better = local_max > max_sc[...]
    idx_sc[...] = jnp.where(better, global_idx, idx_sc[...])
    max_sc[...] = jnp.where(better, local_max, max_sc[...])

    @pl.when(j == pl.num_programs(1) - 1)
    def _finalize():
        out_ref[...] = idx_sc[...]


def greedy_head(m_logits, *, tt=256, tv=2048):
    """m_logits: [..., V] logits -> [..., 1] int32 greedy token indices."""
    orig_shape = m_logits.shape
    V = orig_shape[-1]
    T = 1
    for d in orig_shape[:-1]:
        T *= d
    T = max(T, 1)
    x = m_logits.reshape(T, V)

    tt = min(tt, T)
    tv = min(tv, V)
    Tp = pl.cdiv(T, tt) * tt
    Vp = pl.cdiv(V, tv) * tv
    if Tp != T or Vp != V:
        # Pad vocab with -inf so padded columns never win the argmax; padded
        # rows are sliced off below.
        x = jnp.pad(x, ((0, Tp - T), (0, Vp - V)), constant_values=-jnp.inf)

    grid = (Tp // tt, Vp // tv)
    tokens = pl.pallas_call(
        _greedy_head_kernel,
        out_shape=jax.ShapeDtypeStruct((Tp, 1), jnp.int32),
        grid_spec=pltpu.PrefetchScalarGridSpec(
            num_scalar_prefetch=0,
            grid=grid,
            in_specs=[pl.BlockSpec((tt, tv), lambda i, j: (i, j))],
            out_specs=pl.BlockSpec((tt, 1), lambda i, j: (i, 0)),
            scratch_shapes=[
                pltpu.VMEM((tt, 1), jnp.float32),   # running max per row
                pltpu.VMEM((tt, 1), jnp.int32),     # running argmax per row
            ],
        ),
        compiler_params=pltpu.CompilerParams(
            dimension_semantics=("parallel", "arbitrary"),
        ),
        cost_estimate=pl.CostEstimate(
            flops=2 * Tp * Vp,
            transcendentals=0,
            bytes_accessed=Tp * Vp * x.dtype.itemsize + Tp * 4,
        ),
    )(x)

    tokens = tokens[:T]
    return tokens.reshape(orig_shape[:-1] + (1,))


if __name__ == "__main__":
    # Small deterministic shapes consistent with the module: [tokens, vocab]
    # logits fed to the greedy argmax.  tokens=8, vocab=512, with tv=128 so
    # the reduction actually streams over 4 vocab tiles.
    T, V = 8, 512
    key = jax.random.PRNGKey(0)
    m_logits = jax.random.normal(key, (T, V), dtype=jnp.float32)

    token = greedy_head(m_logits, tt=8, tv=128)
    token = jax.block_until_ready(token)

    ref = jnp.argmax(m_logits.astype(jnp.float32), axis=-1,
                     keepdims=True).astype(jnp.int32)
    assert token.shape == (T, 1)
    assert token.dtype == jnp.int32
    assert jnp.array_equal(token, ref)

    # Also exercise the ragged / padded path (T=5, V=300 padded to 384).
    sub = m_logits[:5, :300]
    token2 = jax.block_until_ready(greedy_head(sub, tt=8, tv=128))
    ref2 = jnp.argmax(sub, axis=-1, keepdims=True).astype(jnp.int32)
    assert jnp.array_equal(token2, ref2)

    print("KERNEL_OK")
</pallas_src>

<mosaic_0001>
module attributes {stable_mosaic.version = 11 : i64} {
  func.func @_greedy_head_kernel(%arg0: i32, %arg1: i32, %arg2: memref<8x128xf32, #tpu.memory_space<vmem>>, %arg3: memref<8x1xi32, #tpu.memory_space<vmem>>, %arg4: memref<8x1xf32, #tpu.memory_space<vmem>>, %arg5: memref<8x1xi32, #tpu.memory_space<vmem>>) attributes {dimension_semantics = [#tpu.dimension_semantics<parallel>, #tpu.dimension_semantics<arbitrary>], iteration_bounds = array<i64: 1, 4>, scalar_prefetch = 0 : i64, scratch_operands = 2 : i64, tpu.core_type = #tpu.core_type<tc>, window_params = [{transform_indices = @transform_0, window_bounds = array<i64: 8, 128>}, {transform_indices = @transform_1, window_bounds = array<i64: 8, 1>}]} {
    %c0_i32 = arith.constant 0 : i32
    %0 = arith.cmpi eq, %arg1, %c0_i32 : i32
    %1 = arith.extui %0 : i1 to i32
    %c0_i32_0 = arith.constant 0 : i32
    %2 = arith.cmpi ne, %1, %c0_i32_0 : i32
    scf.if %2 {
      %cst_14 = arith.constant 0xFF800000 : f32
      %27 = vector.broadcast %cst_14 : f32 to vector<8x1xf32>
      %c0_15 = arith.constant 0 : index
      %c0_16 = arith.constant 0 : index
      %28 = vector.load %arg4[%c0_15, %c0_16] : memref<8x1xf32, #tpu.memory_space<vmem>>, vector<8x1xf32>
      tpu.vector_store %arg4[%c0_15, %c0_16], %27 {strides = array<i32>} : memref<8x1xf32, #tpu.memory_space<vmem>>, vector<8x1xf32>,
      %c0_i32_17 = arith.constant 0 : i32
      %29 = vector.broadcast %c0_i32_17 : i32 to vector<8x1xi32>
      %c0_18 = arith.constant 0 : index
      %c0_19 = arith.constant 0 : index
      %30 = vector.load %arg5[%c0_18, %c0_19] : memref<8x1xi32, #tpu.memory_space<vmem>>, vector<8x1xi32>
      tpu.vector_store %arg5[%c0_18, %c0_19], %29 {strides = array<i32>} : memref<8x1xi32, #tpu.memory_space<vmem>>, vector<8x1xi32>,
    } else {
    }
    %c0 = arith.constant 0 : index
    %c0_1 = arith.constant 0 : index
    %3 = vector.load %arg2[%c0, %c0_1] : memref<8x128xf32, #tpu.memory_space<vmem>>, vector<8x128xf32>
    %cst = arith.constant dense<0xFF800000> : vector<8xf32>
    %4 = vector.multi_reduction <maximumf>, %3, %cst [1] : vector<8x128xf32> to vector<8xf32>
    %5 = vector.shape_cast %4 : vector<8xf32> to vector<8x1xf32>
    %6 = tpu.iota {dimensions = array<i32: 1>} : vector<8x128xi32>
    %7 = vector.broadcast %5 : vector<8x1xf32> to vector<8x128xf32>
    %8 = arith.cmpf oeq, %3, %7 : vector<8x128xf32>
    %c2147483647_i32 = arith.constant 2147483647 : i32
    %9 = vector.broadcast %c2147483647_i32 : i32 to vector<8x128xi32>
    %10 = arith.select %8, %6, %9 : vector<8x128xi1>, vector<8x128xi32>
    %cst_2 = arith.constant dense<2147483647> : vector<8xi32>
    %11 = vector.multi_reduction <minsi>, %10, %cst_2 [1] : vector<8x128xi32> to vector<8xi32>
    %12 = vector.shape_cast %11 : vector<8xi32> to vector<8x1xi32>
    %c128_i32 = arith.constant 128 : i32
    %13 = arith.muli %arg1, %c128_i32 : i32
    %14 = vector.broadcast %13 : i32 to vector<8x1xi32>
    %15 = arith.addi %12, %14 : vector<8x1xi32>
    %c0_3 = arith.constant 0 : index
    %c0_4 = arith.constant 0 : index
    %16 = vector.load %arg4[%c0_3, %c0_4] : memref<8x1xf32, #tpu.memory_space<vmem>>, vector<8x1xf32>
    %17 = arith.cmpf ogt, %5, %16 : vector<8x1xf32>
    %c0_5 = arith.constant 0 : index
    %c0_6 = arith.constant 0 : index
    %18 = vector.load %arg5[%c0_5, %c0_6] : memref<8x1xi32, #tpu.memory_space<vmem>>, vector<8x1xi32>
    %19 = arith.select %17, %15, %18 : vector<8x1xi1>, vector<8x1xi32>
    %c0_7 = arith.constant 0 : index
    %c0_8 = arith.constant 0 : index
    %20 = vector.load %arg5[%c0_7, %c0_8] : memref<8x1xi32, #tpu.memory_space<vmem>>, vector<8x1xi32>
    tpu.vector_store %arg5[%c0_7, %c0_8], %19 {strides = array<i32>} : memref<8x1xi32, #tpu.memory_space<vmem>>, vector<8x1xi32>,
    %c0_9 = arith.constant 0 : index
    %c0_10 = arith.constant 0 : index
    %21 = vector.load %arg4[%c0_9, %c0_10] : memref<8x1xf32, #tpu.memory_space<vmem>>, vector<8x1xf32>
    %22 = arith.select %17, %5, %21 : vector<8x1xi1>, vector<8x1xf32>
    %c0_11 = arith.constant 0 : index
    %c0_12 = arith.constant 0 : index
    %23 = vector.load %arg4[%c0_11, %c0_12] : memref<8x1xf32, #tpu.memory_space<vmem>>, vector<8x1xf32>
    tpu.vector_store %arg4[%c0_11, %c0_12], %22 {strides = array<i32>} : memref<8x1xf32, #tpu.memory_space<vmem>>, vector<8x1xf32>,
    %c3_i32 = arith.constant 3 : i32
    %24 = arith.cmpi eq, %arg1, %c3_i32 : i32
    %25 = arith.extui %24 : i1 to i32
    %c0_i32_13 = arith.constant 0 : i32
    %26 = arith.cmpi ne, %25, %c0_i32_13 : i32
    scf.if %26 {
      %c0_14 = arith.constant 0 : index
      %c0_15 = arith.constant 0 : index
      %27 = vector.load %arg5[%c0_14, %c0_15] : memref<8x1xi32, #tpu.memory_space<vmem>>, vector<8x1xi32>
      %c0_16 = arith.constant 0 : index
      %c0_17 = arith.constant 0 : index
      %28 = vector.load %arg3[%c0_16, %c0_17] : memref<8x1xi32, #tpu.memory_space<vmem>>, vector<8x1xi32>
      tpu.vector_store %arg3[%c0_16, %c0_17], %27 {strides = array<i32>} : memref<8x1xi32, #tpu.memory_space<vmem>>, vector<8x1xi32>,
    } else {
    }
    return
  }
  func.func @transform_0(%arg0: i32, %arg1: i32) -> (i32, i32) {
    %c0_i32 = arith.constant 0 : i32
    return %arg0, %arg1 : i32, i32
  }
  func.func @transform_1(%arg0: i32, %arg1: i32) -> (i32, i32) {
    %c0_i32 = arith.constant 0 : i32
    %c0_i32_0 = arith.constant 0 : i32
    return %arg0, %c0_i32 : i32, i32
  }
}

</mosaic_0001>

<llo_original>
// kernel: tpu_custom_call.1
$region0: #{tpu_custom_call.1}
  #allocation0 [shape = 'u32[]', space=smem, size = 0x4, offset = 0x4, fixed_abs, tag = 'smem constant byte address 0x4 - core index']
  #allocation1 [shape = 'u32[72,128]{1,0:T(1,128)}', space=vmem, size = 0x9000, scoped, tag = 'internal scratch']
  #allocation2 [shape = 'f32[8,1]{1,0:T(8,128)}', space=vmem, size = 0x1000, scoped, tag = 'scratch operand']
  #allocation3 [shape = 's32[8,1]{1,0:T(8,128)}', space=vmem, size = 0x1000, scoped, tag = 'scratch operand']
  %s0 = inlined_call_operand.hbm [shape: f32[8,512], index: 0, kind: input, shape index: {}]
  %s1 = inlined_call_operand.vmem [shape: s32[8,1], index: 1, kind: output, shape index: {}]
  %s2 = sld [smem:[#allocation0]]
  $region49: #{tpu_custom_call.1} parent=0
    _
  %s4 = ssub.s32 1, %s2
  %s5 = scalar_select 0, %s4, %s2
  $region1: #{tpu_custom_call.1} parent=0
    #allocation4 [shape = 'u8[8192]{0}', space=vmem, size = 0x2000, scoped, tag = 'input window, operand 0']
    #allocation5 [shape = 's32[2]{0}', space=sflag, size = 0x8, scoped, tag = 'scoped memory for tpu_custom_call.1']
    %6 = vsyncpa [#allocation5], 0
    %s7 = scalar_lea.sflag [#allocation5], 1
    %8 = vsyncpa %s7, 0
    loop: start=0, step=1, limit=6
    $region2: #{tpu_custom_call.1} parent=1 // loop_pre_header
      _
    $region3: #{tpu_custom_call.1} parent=1 // loop_header
      %s10 = sphi 0, %s14
      %p11 = scmp.ge.s32.totalorder %s10, 6
      %s17 = sphi 0, %s29
      %s18 = sphi 0, %s25
      %s19 = sphi 0, %s17
      %s20 = sphi 0, %s18
      %s21 = sphi 0, %s19
      %s22 = sphi 0, %s20
      %s34 = sphi 0, %s36
      %s37 = sphi 0, %s34
      %s38 = sphi 0, %s37
      %s54 = sphi 0, %s38
      %s60 = sphi 0, %s62
      %s63 = sphi 0, %s60
      %s64 = sphi 0, %s63
      %s80 = sphi 0, %s64
    $region4: #{tpu_custom_call.1} parent=1 // loop_header_branch
      %13 = sbr.rel (%p11) target = $region8
    $region5: #{tpu_custom_call.1} parent=1 // loop_body
      %s15 = ssub.s32 %s10, 1
      %s16 = ssub.s32 %s10, 2
      %s23 = sadd.s32 1, %s18
      %p24 = scmp.ge.s32.totalorder %s23, 4
      %s25 = scalar_select %p24, 0, %s23
      %s26 = sadd.s32 1, %s17
      %s27 = scalar_select %p24, %s26, %s17
      %p28 = scmp.ge.s32.totalorder %s27, 1
      %s29 = scalar_select %p28, 0, %s27
      %s30 = ssub.s32 %s17, %s29
      %s31 = ssub.s32 %s18, %s25
      %s32 = sor.u32 %s30, %s31
      %p33 = scmp.eq.s32.totalorder %s32, 0
      %s35 = sadd.s32 %s34, 1
      %s36 = scalar_select %p33, %s34, %s35
      %p39 = pneg %p33
      %p40 = scmp.eq.s32.totalorder %s10, 3
      %p41 = por %p39, %p40
      %p42 = scmp.ne.s32.totalorder %s34, %s37
      %p43 = scmp.eq.s32.totalorder %s10, 0
      %p44 = por %p42, %p43
      %p45 = scmp.ne.s32.totalorder %s34, %s37
      %p46 = scmp.eq.s32.totalorder %s15, 3
      %p47 = por %p45, %p46
      %p48 = scmp.ne.s32.totalorder %s37, %s38
      %p49 = scmp.eq.s32.totalorder %s15, 0
      %p50 = por %p48, %p49
      %p51 = scmp.ne.s32.totalorder %s37, %s38
      %p52 = scmp.eq.s32.totalorder %s16, 3
      %p53 = por %p51, %p52
      %p55 = scmp.ne.s32.totalorder %s38, %s54
      %p56 = scmp.eq.s32.totalorder %s16, 0
      %p57 = por %p55, %p56
      %s58 = ssub.s32 %s17, %s29
      %p59 = scmp.eq.s32.totalorder %s58, 0
      %s61 = sadd.s32 %s60, 1
      %s62 = scalar_select %p59, %s60, %s61
      %p65 = pneg %p59
      %p66 = scmp.eq.s32.totalorder %s10, 3
      %p67 = por %p65, %p66
      %p68 = scmp.ne.s32.totalorder %s60, %s63
      %p69 = scmp.eq.s32.totalorder %s10, 0
      %p70 = por %p68, %p69
      %p71 = scmp.ne.s32.totalorder %s60, %s63
      %p72 = scmp.eq.s32.totalorder %s15, 3
      %p73 = por %p71, %p72
      %p74 = scmp.ne.s32.totalorder %s63, %s64
      %p75 = scmp.eq.s32.totalorder %s15, 0
      %p76 = por %p74, %p75
      %p77 = scmp.ne.s32.totalorder %s63, %s64
      %p78 = scmp.eq.s32.totalorder %s16, 3
      %p79 = por %p77, %p78
      %p81 = scmp.ne.s32.totalorder %s64, %s80
      %p82 = scmp.eq.s32.totalorder %s16, 0
      %p83 = por %p81, %p82
      %p84 = scmp.le.s32.totalorder 1, %s10
      %p85 = scmp.lt.s32.totalorder %s10, 5
      %p86 = pnand %p84, %p85
      %p87 = pneg %p86
      // Predicated region
      $region9: #{tpu_custom_call.1} parent=5 // pred_check
        _
      $region10: #{tpu_custom_call.1} parent=5 // pred_check_branch
        %89 = sbr.rel (%p86) target = $region12
      $region11: #{tpu_custom_call.1} parent=5 // pred_region
        %s90 = ssub.s32 %s10, 1
      $region12: #{tpu_custom_call.1} parent=5 // pred_fallthru
        _
      %p91 = scmp.lt.s32.totalorder %s10, 4
      // Predicated region
      $region13: #{tpu_custom_call.1} parent=5 // pred_check
        %p92 = pneg %p91
      $region14: #{tpu_custom_call.1} parent=5 // pred_check_branch
        %94 = sbr.rel (%p92) target = $region16
      $region15: #{tpu_custom_call.1} parent=5 // pred_region
        // Predicated region
        $region17: #{tpu_custom_call.1} parent=15 // pred_check
          %p95 = pneg %p44
        $region18: #{tpu_custom_call.1} parent=15 // pred_check_branch
          %97 = sbr.rel (%p95) target = $region20
        $region19: #{tpu_custom_call.1} parent=15 // pred_region
          %s98 = sand.u32 %s34, 1
          %s99 = scalar_lea.sflag [#allocation5], %s98
          %s100 = sand.u32 %s34, 1
          %s101 = smul.addr %s100, 8
          %s102 = scalar_lea.vmem [#allocation4], %s101
          %104 = vsyncadd %s99, 0
          %s105 = smul.addr %s17, 4
          %s106 = sadd.s32 %s18, %s105
          %s107 = smul.addr %s106, 8
          %s108 = scalar_lea.hbm %s0, %s107
          %s110 = sshll.u32 %s108, 4
          %s111 = int_to_ptr.hbm [resolvable:$true] %s110
          %s112 = sshll.u32 %s102, 4
          %s113 = int_to_ptr.vmem [resolvable:$true] %s112
          %115 = dma.hbm_to_vmem [thread:$0]  %s111, 128, %s113, %s99
        $region20: #{tpu_custom_call.1} parent=15 // pred_fallthru
          _
      $region16: #{tpu_custom_call.1} parent=5 // pred_fallthru
        _
      %p116 = scmp.le.s32.totalorder 1, %s10
      %p117 = scmp.lt.s32.totalorder %s10, 5
      %p118 = pnand %p116, %p117
      %p119 = pneg %p118
      // Predicated region
      $region21: #{tpu_custom_call.1} parent=5 // pred_check
        _
      $region22: #{tpu_custom_call.1} parent=5 // pred_check_branch
        %121 = sbr.rel (%p118) target = $region24
      $region23: #{tpu_custom_call.1} parent=5 // pred_region
        %s122 = ssub.s32 %s10, 1
        %s123 = sand.u32 %s37, 1
        %s124 = scalar_lea.sflag [#allocation5], %s123
        %s125 = sand.u32 %s37, 1
        %s126 = smul.addr %s125, 8
        %s127 = scalar_lea.vmem [#allocation4], %s126
        // Predicated region
        $region25: #{tpu_custom_call.1} parent=23 // pred_check
          %p128 = pneg %p50
        $region26: #{tpu_custom_call.1} parent=23 // pred_check_branch
          %130 = sbr.rel (%p128) target = $region28
        $region27: #{tpu_custom_call.1} parent=23 // pred_region
          %132 = dma.done %s124, 128
        $region28: #{tpu_custom_call.1} parent=23 // pred_fallthru
          _
        %s133 = sand.u32 %s37, 1
        %s134 = scalar_lea.sflag [#allocation5], %s133
        %s135 = sand.u32 %s37, 1
        %s136 = smul.addr %s135, 8
        %s137 = scalar_lea.vmem [#allocation4], %s136
        %p138 = pneg %p50
        %p139 = pneg %p47
        %p140 = pneg %p76
        %p141 = pneg %p73
        %p142 = scmp.lt.s32.totalorder %s19, 0
        %s143 = scalar_select %p142, %s19, 0
        %s144 = smul.addr %s143, 8
        %s145 = scalar_lea.vmem %s1, %s144
        %p146 = scmp.lt.s32.totalorder %s19, 0
        %s147 = scalar_select %p146, %s19, 0
        %s148 = smul.addr %s147, 8
        %s149 = scalar_lea.vmem %s1, %s148
        %p150 = scmp.eq.s32.totalorder %s20, 0
        // Predicated region
        $region29: #{tpu_custom_call.1} parent=23 // pred_check
          %p151 = pneg %p150
        $region30: #{tpu_custom_call.1} parent=23 // pred_check_branch
          %153 = sbr.rel (%p151) target = $region32
        $region31: #{tpu_custom_call.1} parent=23 // pred_region
          %vm154 = vcmask 7168
          %155 = vst.msk [vmem:[#allocation2] sm:$0xff] %vm154, -inf
          %156 = vst.msk [vmem:[#allocation3] sm:$0xff] %vm154, 0
        $region32: #{tpu_custom_call.1} parent=23 // pred_fallthru
          _
        %v157 = vld [vmem:[%s127] sm:$0xff]
        %158 = vmax.xlane.f32.xlu0 %v157
        %v159 = vpop.xlane.xlu0 %158
        %v160 = vlaneseq
        %v161 = vand.u32 %v160, 127
        %vm162 = vcmp.eq.f32.partialorder %v157, %v159
        %v163 = vsel %vm162, %v161, 2147483647
        %v164 = vand.u32 %v163, 65535
        %v165 = vshra.s32 %v163, 16
        %v166 = vcvt.s32.f32 %v164
        %v167 = vcvt.s32.f32 %v165
        %168 = vmin.xlane.f32.xlu0 %v167
        %v169 = vpop.xlane.xlu0 %168
        %vm170 = vcmp.eq.f32.partialorder %v167, %v169
        %v171 = vsel %vm170, %v166, inf
        %172 = vmin.xlane.f32.xlu0 %v171
        %v173 = vpop.xlane.xlu0 %172
        %v174 = vcvt.f32.s32 %v173
        %v175 = vcvt.f32.s32 %v169
        %v176 = vshll.u32 %v175, 16
        %v177 = vadd.s32 %v176, %v174
        %s178 = smul.u32 %s20, 128
        %v179 = vstv %s178
        %v180 = vadd.s32 %v177, %v179
        %v181 = vld [vmem:[#allocation2] sm:$0xff]
        %vm182 = vcmp.gt.f32.partialorder %v159, %v181
        %v183 = vld [vmem:[#allocation3] sm:$0xff]
        %v184 = vsel %vm182, %v180, %v183
        %vm185 = vcmask 7168
        %186 = vst.msk [vmem:[#allocation3] sm:$0xff] %vm185, %v184
        %v187 = vld [vmem:[#allocation2] sm:$0xff]
        %v188 = vsel %vm182, %v159, %v187
        %189 = vst.msk [vmem:[#allocation2] sm:$0xff] %vm185, %v188
        %p190 = scmp.eq.s32.totalorder %s20, 3
        // Predicated region
        $region33: #{tpu_custom_call.1} parent=23 // pred_check
          %p191 = pneg %p190
        $region34: #{tpu_custom_call.1} parent=23 // pred_check_branch
          %193 = sbr.rel (%p191) target = $region36
        $region35: #{tpu_custom_call.1} parent=23 // pred_region
          %v194 = vld [vmem:[#allocation3] sm:$0xff]
          %195 = vst.msk [vmem:[%s149] sm:$0xff] %vm185, %v194
        $region36: #{tpu_custom_call.1} parent=23 // pred_fallthru
          _
        %p196 = scmp.lt.s32.totalorder %s19, 0
        %s197 = scalar_select %p196, %s19, 0
        %s198 = smul.addr %s197, 8
        %s199 = scalar_lea.vmem %s1, %s198
        // Predicated region
        $region37: #{tpu_custom_call.1} parent=23 // pred_check
          %p200 = pneg %p73
        $region38: #{tpu_custom_call.1} parent=23 // pred_check_branch
          %202 = sbr.rel (%p200) target = $region40
        $region39: #{tpu_custom_call.1} parent=23 // pred_region
          _
        $region40: #{tpu_custom_call.1} parent=23 // pred_fallthru
          _
        // Predicated region
        $region41: #{tpu_custom_call.1} parent=23 // pred_check
          %p203 = pneg %p73
        $region42: #{tpu_custom_call.1} parent=23 // pred_check_branch
          %205 = sbr.rel (%p203) target = $region44
        $region43: #{tpu_custom_call.1} parent=23 // pred_region
          %p206 = scmp.lt.s32.totalorder %s19, 0
          %s207 = scalar_select %p206, %s19, 0
          %s208 = smul.addr %s207, 8
          %s209 = scalar_lea.vmem %s1, %s208
        $region44: #{tpu_custom_call.1} parent=23 // pred_fallthru
          _
      $region24: #{tpu_custom_call.1} parent=5 // pred_fallthru
        _
      %p210 = scmp.le.s32.totalorder 2, %s10
      // Predicated region
      $region45: #{tpu_custom_call.1} parent=5 // pred_check
        %p211 = pneg %p210
      $region46: #{tpu_custom_call.1} parent=5 // pred_check_branch
        %213 = sbr.rel (%p211) target = $region48
      $region47: #{tpu_custom_call.1} parent=5 // pred_region
        %s214 = ssub.s32 %s10, 2
      $region48: #{tpu_custom_call.1} parent=5 // pred_fallthru
        _
    $region6: #{tpu_custom_call.1} parent=1 // loop_footer
      %s14 = sadd.s32 1, %s10
    $region7: #{tpu_custom_call.1} parent=1 // loop_footer_branch
      %9 = sbr.rel target = $region3
    $region8: #{tpu_custom_call.1} parent=1 // loop_exit
      _
    %215 = vsyncpa [#allocation5], 1
    %s216 = scalar_lea.sflag [#allocation5], 1
    %217 = vsyncpa %s216, 1

</llo_original>
